<compile_context>
chip_gen: v6e
topology: v6e:2x2x1
jax: 0.10.0
libtpu: 0.0.40
codegen_flags: <defaults>
</compile_context>

<pallas_src>
import math

import jax
import jax.numpy as jnp
from jax.experimental import pallas as pl
from jax.experimental.pallas import tpu as pltpu


def _round_up(x, m):
    return ((x + m - 1) // m) * m


# ----------------------------------------------------------------------------
# Pass 1: degree / normalization prep.
#   dinv = rsqrt(clamp(rowsum(A), 1));  y = dinv * (X @ W)
# Grid: (row tiles, column tiles); degree accumulated across column tiles.
# ----------------------------------------------------------------------------
def _prep_kernel(a_ref, x_ref, w_ref, dinv_ref, y_ref, acc_ref):
    j = pl.program_id(1)

    @pl.when(j == 0)
    def _init():
        acc_ref[...] = jnp.zeros_like(acc_ref)

    # partial row-sum of this [TM, TN] adjacency tile
    acc_ref[...] += jnp.sum(a_ref[...], axis=1, keepdims=True)

    @pl.when(j == pl.num_programs(1) - 1)
    def _finalize():
        dinv = jax.lax.rsqrt(jnp.maximum(acc_ref[...], 1.0))      # D^{-1/2}
        dinv_ref[...] = dinv
        y_ref[...] = dinv * jnp.dot(x_ref[...], w_ref[...],
                                    preferred_element_type=jnp.float32)


# ----------------------------------------------------------------------------
# Pass 2: score = dinv * (A @ y) + b, plus fused tanh(score).
# Grid: (row tiles, column tiles); A@y accumulated across column tiles.
# ----------------------------------------------------------------------------
def _score_kernel(a_ref, y_ref, dinv_ref, b_ref, score_ref, tanh_ref, acc_ref):
    j = pl.program_id(1)

    @pl.when(j == 0)
    def _init():
        acc_ref[...] = jnp.zeros_like(acc_ref)

    acc_ref[...] += jnp.dot(a_ref[...], y_ref[...],
                            preferred_element_type=jnp.float32)

    @pl.when(j == pl.num_programs(1) - 1)
    def _finalize():
        s = acc_ref[...] * dinv_ref[...] + b_ref[0]               # bias from SMEM
        score_ref[...] = s
        tanh_ref[...] = jnp.tanh(s)


def graphconv_score(adj, feat, weight, bias):
    """DGL GraphConv(in_dim, 1), norm='both': D^-1/2 A D^-1/2 X W + b.

    Returns (score [N,1], tanh(score) [N,1]).
    Assumes A is symmetric with self-loops (in-degree == out-degree).
    """
    n, f = feat.shape
    n_pad = _round_up(n, 128)
    tm = math.gcd(n_pad, 256)      # row tile   (128 or 256)
    tn = math.gcd(n_pad, 512)      # column tile (128 / 256 / 512)

    # Zero-pad so the grid divides evenly; padded rows get deg=0 -> clamped to 1
    # and padded columns contribute nothing.
    adj_p = jnp.pad(adj, ((0, n_pad - n), (0, n_pad - n)))
    feat_p = jnp.pad(feat, ((0, n_pad - n), (0, 0)))

    grid = (n_pad // tm, n_pad // tn)
    cparams = pltpu.CompilerParams(
        dimension_semantics=("parallel", "arbitrary"),   # rows shard across TCs (v7x)
        vmem_limit_bytes=32 * 1024 * 1024)               # safe on v5e/v6e/v7x

    # TODO(synk): for very unbalanced batches, a per-graph grid (scalar-prefetched
    # offsets) that DMAs only the [n_g, n_g] diagonal blocks would cut HBM traffic
    # from N^2 to sum(n_g^2); the dense tiled version below is kept for simplicity.

    # ---- Pass 1: dinv and y = dinv * (X @ W) ----
    dinv, y = pl.pallas_call(
        _prep_kernel,
        out_shape=(jax.ShapeDtypeStruct((n_pad, 1), jnp.float32),
                   jax.ShapeDtypeStruct((n_pad, 1), jnp.float32)),
        grid_spec=pltpu.PrefetchScalarGridSpec(
            num_scalar_prefetch=0,
            grid=grid,
            in_specs=[
                pl.BlockSpec((tm, tn), lambda i, j: (i, j)),   # A tile
                pl.BlockSpec((tm, f), lambda i, j: (i, 0)),    # X rows (refetch-free over j)
                pl.BlockSpec((f, 1), lambda i, j: (0, 0)),     # W (fetched once)
            ],
            out_specs=[
                pl.BlockSpec((tm, 1), lambda i, j: (i, 0)),    # dinv
                pl.BlockSpec((tm, 1), lambda i, j: (i, 0)),    # y
            ],
            scratch_shapes=[pltpu.VMEM((tm, 1), jnp.float32)]),
        compiler_params=cparams,
    )(adj_p, feat_p, weight)

    # ---- Pass 2: score = dinv * (A @ y) + b ; tanh(score) ----
    score_p, tanh_p = pl.pallas_call(
        _score_kernel,
        out_shape=(jax.ShapeDtypeStruct((n_pad, 1), jnp.float32),
                   jax.ShapeDtypeStruct((n_pad, 1), jnp.float32)),
        grid_spec=pltpu.PrefetchScalarGridSpec(
            num_scalar_prefetch=0,
            grid=grid,
            in_specs=[
                pl.BlockSpec((tm, tn), lambda i, j: (i, j)),   # A tile
                pl.BlockSpec((tn, 1), lambda i, j: (j, 0)),    # y column slice
                pl.BlockSpec((tm, 1), lambda i, j: (i, 0)),    # dinv row slice
                pl.BlockSpec(memory_space=pltpu.MemorySpace.SMEM),  # bias scalar
            ],
            out_specs=[
                pl.BlockSpec((tm, 1), lambda i, j: (i, 0)),    # score
                pl.BlockSpec((tm, 1), lambda i, j: (i, 0)),    # tanh(score)
            ],
            scratch_shapes=[pltpu.VMEM((tm, 1), jnp.float32)]),
        compiler_params=cparams,
    )(adj_p, y, dinv, bias)

    return score_p[:n], tanh_p[:n]


# ----------------------------------------------------------------------------
# Pass 3: batched row gather + scale.
#   out[i, :] = feature[perm[i], :] * tanh_score[perm[i]]
# R permuted rows per grid step: perm in SMEM (scalar prefetch), features left
# in HBM and gathered with manual double-buffered DMA, one dense (R,F) store.
# ----------------------------------------------------------------------------
_GATHER_ROWS = 16   # rows per grid step (>=8 keeps the store sublane-dense)


def _gather_kernel(perm_ref, feat_hbm, scale_ref, out_ref, buf, sems):
    i = pl.program_id(0)
    nblk = pl.num_programs(0)
    r_rows = buf.shape[1]

    def start_fetch(blk, slot):
        for r in range(r_rows):
            row = perm_ref[blk * r_rows + r]
            pltpu.make_async_copy(
                feat_hbm.at[pl.ds(row, 1), :],
                buf.at[slot, pl.ds(r, 1), :],
                sems.at[slot, r]).start()

    @pl.when(i == 0)
    def _prime():
        start_fetch(0, 0)

    slot = jax.lax.rem(i, 2)

    # wait for this block's rows
    for r in range(r_rows):
        pltpu.make_async_copy(
            feat_hbm.at[pl.ds(0, 1), :],          # dummy src (shape only)
            buf.at[slot, pl.ds(r, 1), :],
            sems.at[slot, r]).wait()

    # prefetch next block into the other buffer
    @pl.when(i + 1 < nblk)
    def _prefetch():
        start_fetch(i + 1, 1 - slot)

    out_ref[...] = buf[slot] * scale_ref[...]


def gather_and_scale(feat, scale, perm):
    """out[i] = feat[perm[i]] * scale[i], scale is [K,1] (already tanh'ed/gathered)."""
    k = perm.shape[0]
    n, f = feat.shape
    r_rows = _GATHER_ROWS
    kp = _round_up(max(k, 1), r_rows)

    perm_p = jnp.pad(perm.astype(jnp.int32), (0, kp - k))          # pad with row 0
    scale_p = jnp.pad(scale, ((0, kp - k), (0, 0)))

    grid_spec = pltpu.PrefetchScalarGridSpec(
        num_scalar_prefetch=1,                                     # perm -> SMEM
        grid=(kp // r_rows,),
        in_specs=[
            pl.BlockSpec(memory_space=pl.ANY),                     # feat stays in HBM
            pl.BlockSpec((r_rows, 1), lambda i, perm: (i, 0)),     # per-block scales
        ],
        out_specs=pl.BlockSpec((r_rows, f), lambda i, perm: (i, 0)),
        scratch_shapes=[
            pltpu.VMEM((2, r_rows, f), feat.dtype),                # double-buffered gather
            pltpu.SemaphoreType.DMA((2, r_rows)),
        ])

    out = pl.pallas_call(
        _gather_kernel,
        out_shape=jax.ShapeDtypeStruct((kp, f), feat.dtype),
        grid_spec=grid_spec,
        # "arbitrary": steps carry the cross-step double-buffer priming, so they
        # must run sequentially on one core (parallel sharding would break priming).
        compiler_params=pltpu.CompilerParams(dimension_semantics=("arbitrary",)),
    )(perm_p, feat, scale_p)
    return out[:k]


# ----------------------------------------------------------------------------
# Plain-JAX glue: per-graph top-k selection (the `topk` helper of the example).
# TODO(synk): sorting / top-k has no clean Pallas TPU primitive; done with jnp.argsort.
# ----------------------------------------------------------------------------
def topk_per_graph(score_flat, batch_num_nodes, ratio):
    offsets = [0]
    for n in batch_num_nodes[:-1]:
        offsets.append(offsets[-1] + n)
    perms, next_nums = [], []
    for g, n in enumerate(batch_num_nodes):
        s_g = jax.lax.dynamic_slice(score_flat, (offsets[g],), (n,))
        order = jnp.argsort(-s_g)                        # descending
        k = int(math.ceil(ratio * n))
        perms.append(order[:k].astype(jnp.int32) + jnp.int32(offsets[g]))
        next_nums.append(k)
    return jnp.concatenate(perms), jnp.asarray(next_nums, dtype=jnp.int32)


# ----------------------------------------------------------------------------
# SAGPool module equivalent.
# ----------------------------------------------------------------------------
class SAGPoolPallas:
    def __init__(self, in_dim, ratio=0.5, key=None):
        self.in_dim = in_dim
        self.ratio = ratio
        key = jax.random.PRNGKey(0) if key is None else key
        # DGL GraphConv init: xavier_uniform weight [in_dim, 1], zero bias.
        bound = math.sqrt(6.0 / (in_dim + 1))
        self.weight = jax.random.uniform(
            key, (in_dim, 1), jnp.float32, minval=-bound, maxval=bound)
        self.bias = jnp.zeros((1,), jnp.float32)

    def __call__(self, adj, batch_num_nodes, feature):
        # GraphConv score + fused tanh (Pallas, tiled).
        score, tanh_score = graphconv_score(adj, feature, self.weight, self.bias)
        score_flat = score[:, 0]                                    # .squeeze()
        perm, next_batch_num_nodes = topk_per_graph(
            score_flat, batch_num_nodes, self.ratio)
        # Tiny K-element gather of the precomputed tanh scores (plain JAX glue).
        scale = tanh_score[perm]                                    # [K, 1]
        pooled = gather_and_scale(feature, scale, perm)             # [K, F]
        # TODO(synk): dgl.node_subgraph / set_batch_num_nodes is graph-structure
        # bookkeeping with no Pallas equivalent; we return perm + next sizes instead.
        return pooled, perm, next_batch_num_nodes


if __name__ == "__main__":
    key = jax.random.PRNGKey(0)
    k_feat, k_adj, k_w = jax.random.split(key, 3)

    batch_num_nodes = [10, 14]          # 2 graphs in the batch
    N = sum(batch_num_nodes)            # 24 nodes total
    in_dim = 32

    feature = jax.random.normal(k_feat, (N, in_dim), jnp.float32)

    # Block-diagonal batched graph: symmetric random adjacency + self-loops per graph.
    adj = jnp.zeros((N, N), jnp.float32)
    off = 0
    for kk, n in zip(jax.random.split(k_adj, len(batch_num_nodes)), batch_num_nodes):
        r = jax.random.uniform(kk, (n, n))
        a = (r < 0.3).astype(jnp.float32)
        a = jnp.maximum(a, a.T)                                 # undirected
        a = jnp.maximum(a, jnp.eye(n, dtype=jnp.float32))       # self-loops
        adj = adj.at[off:off + n, off:off + n].set(a)
        off += n

    pool = SAGPoolPallas(in_dim, ratio=0.5, key=k_w)
    pooled, perm, next_bnn = pool(adj, batch_num_nodes, feature)
    jax.block_until_ready((pooled, perm, next_bnn))

    assert pooled.shape == (int(next_bnn.sum()), in_dim)
    assert bool(jnp.all(jnp.isfinite(pooled)))
    print("KERNEL_OK")
</pallas_src>

<mosaic_0001>
module attributes {stable_mosaic.version = 11 : i64} {
  func.func @_prep_kernel(%arg0: i32, %arg1: i32, %arg2: memref<128x128xf32, #tpu.memory_space<vmem>>, %arg3: memref<128x32xf32, #tpu.memory_space<vmem>>, %arg4: memref<32x1xf32, #tpu.memory_space<vmem>>, %arg5: memref<128x1xf32, #tpu.memory_space<vmem>>, %arg6: memref<128x1xf32, #tpu.memory_space<vmem>>, %arg7: memref<128x1xf32, #tpu.memory_space<vmem>>) attributes {dimension_semantics = [#tpu.dimension_semantics<parallel>, #tpu.dimension_semantics<arbitrary>], iteration_bounds = array<i64: 1, 1>, scalar_prefetch = 0 : i64, scratch_operands = 1 : i64, tpu.core_type = #tpu.core_type<tc>, window_params = [{transform_indices = @transform_0, window_bounds = array<i64: 128, 128>}, {transform_indices = @transform_1, window_bounds = array<i64: 128, 32>}, {pipeline_mode = #tpu.pipeline_mode<synchronous>, transform_indices = @transform_2, window_bounds = array<i64: 32, 1>}, {transform_indices = @transform_3, window_bounds = array<i64: 128, 1>}, {transform_indices = @transform_4, window_bounds = array<i64: 128, 1>}]} {
    %c0_i32 = arith.constant 0 : i32
    %0 = arith.cmpi eq, %arg1, %c0_i32 : i32
    %1 = arith.extui %0 : i1 to i32
    %c0_i32_0 = arith.constant 0 : i32
    %2 = arith.cmpi ne, %1, %c0_i32_0 : i32
    scf.if %2 {
      %cst_8 = arith.constant 0.000000e+00 : f32
      %12 = vector.broadcast %cst_8 : f32 to vector<128x1xf32>
      %c0_9 = arith.constant 0 : index
      %c0_10 = arith.constant 0 : index
      %13 = vector.load %arg7[%c0_9, %c0_10] : memref<128x1xf32, #tpu.memory_space<vmem>>, vector<128x1xf32>
      tpu.vector_store %arg7[%c0_9, %c0_10], %12 {strides = array<i32>} : memref<128x1xf32, #tpu.memory_space<vmem>>, vector<128x1xf32>,
    } else {
    }
    %c0 = arith.constant 0 : index
    %c0_1 = arith.constant 0 : index
    %3 = vector.load %arg7[%c0, %c0_1] : memref<128x1xf32, #tpu.memory_space<vmem>>, vector<128x1xf32>
    %c0_2 = arith.constant 0 : index
    %c0_3 = arith.constant 0 : index
    %4 = vector.load %arg2[%c0_2, %c0_3] : memref<128x128xf32, #tpu.memory_space<vmem>>, vector<128x128xf32>
    %cst = arith.constant dense<0.000000e+00> : vector<128xf32>
    %5 = vector.multi_reduction <add>, %4, %cst [1] : vector<128x128xf32> to vector<128xf32>
    %6 = vector.shape_cast %5 : vector<128xf32> to vector<128x1xf32>
    %7 = arith.addf %3, %6 : vector<128x1xf32>
    %c0_4 = arith.constant 0 : index
    %c0_5 = arith.constant 0 : index
    %8 = vector.load %arg7[%c0_4, %c0_5] : memref<128x1xf32, #tpu.memory_space<vmem>>, vector<128x1xf32>
    tpu.vector_store %arg7[%c0_4, %c0_5], %7 {strides = array<i32>} : memref<128x1xf32, #tpu.memory_space<vmem>>, vector<128x1xf32>,
    %c0_i32_6 = arith.constant 0 : i32
    %9 = arith.cmpi eq, %arg1, %c0_i32_6 : i32
    %10 = arith.extui %9 : i1 to i32
    %c0_i32_7 = arith.constant 0 : i32
    %11 = arith.cmpi ne, %10, %c0_i32_7 : i32
    scf.if %11 {
      %c0_8 = arith.constant 0 : index
      %c0_9 = arith.constant 0 : index
      %12 = vector.load %arg7[%c0_8, %c0_9] : memref<128x1xf32, #tpu.memory_space<vmem>>, vector<128x1xf32>
      %cst_10 = arith.constant 1.000000e+00 : f32
      %13 = vector.broadcast %cst_10 : f32 to vector<128x1xf32>
      %14 = arith.maximumf %12, %13 : vector<128x1xf32>
      %15 = math.rsqrt %14 : vector<128x1xf32>
      %c0_11 = arith.constant 0 : index
      %c0_12 = arith.constant 0 : index
      %16 = vector.load %arg5[%c0_11, %c0_12] : memref<128x1xf32, #tpu.memory_space<vmem>>, vector<128x1xf32>
      tpu.vector_store %arg5[%c0_11, %c0_12], %15 {strides = array<i32>} : memref<128x1xf32, #tpu.memory_space<vmem>>, vector<128x1xf32>,
      %c0_13 = arith.constant 0 : index
      %c0_14 = arith.constant 0 : index
      %17 = vector.load %arg3[%c0_13, %c0_14] : memref<128x32xf32, #tpu.memory_space<vmem>>, vector<128x32xf32>
      %c0_15 = arith.constant 0 : index
      %c0_16 = arith.constant 0 : index
      %18 = vector.load %arg4[%c0_15, %c0_16] : memref<32x1xf32, #tpu.memory_space<vmem>>, vector<32x1xf32>
      %cst_17 = arith.constant dense<0.000000e+00> : vector<128x1xf32>
      %19 = tpu.matmul %17, %18, %cst_17 {dimension_numbers = #tpu.dot_dimension_numbers<[1], [0], [0], [1], [0, 0, 1, 1], [], []>} : vector<128x32xf32>, vector<32x1xf32>, vector<128x1xf32> -> vector<128x1xf32>
      %20 = arith.mulf %15, %19 : vector<128x1xf32>
      %c0_18 = arith.constant 0 : index
      %c0_19 = arith.constant 0 : index
      %21 = vector.load %arg6[%c0_18, %c0_19] : memref<128x1xf32, #tpu.memory_space<vmem>>, vector<128x1xf32>
      tpu.vector_store %arg6[%c0_18, %c0_19], %20 {strides = array<i32>} : memref<128x1xf32, #tpu.memory_space<vmem>>, vector<128x1xf32>,
    } else {
    }
    return
  }
  func.func @transform_0(%arg0: i32, %arg1: i32) -> (i32, i32) {
    %c0_i32 = arith.constant 0 : i32
    return %arg0, %arg1 : i32, i32
  }
  func.func @transform_1(%arg0: i32, %arg1: i32) -> (i32, i32) {
    %c0_i32 = arith.constant 0 : i32
    %c0_i32_0 = arith.constant 0 : i32
    return %arg0, %c0_i32 : i32, i32
  }
  func.func @transform_2(%arg0: i32, %arg1: i32) -> (i32, i32) {
    %c0_i32 = arith.constant 0 : i32
    %c0_i32_0 = arith.constant 0 : i32
    %c0_i32_1 = arith.constant 0 : i32
    return %c0_i32, %c0_i32_0 : i32, i32
  }
  func.func @transform_3(%arg0: i32, %arg1: i32) -> (i32, i32) {
    %c0_i32 = arith.constant 0 : i32
    %c0_i32_0 = arith.constant 0 : i32
    return %arg0, %c0_i32 : i32, i32
  }
  func.func @transform_4(%arg0: i32, %arg1: i32) -> (i32, i32) {
    %c0_i32 = arith.constant 0 : i32
    %c0_i32_0 = arith.constant 0 : i32
    return %arg0, %c0_i32 : i32, i32
  }
}

</mosaic_0001>

<llo_original>
// kernel: tpu_custom_call.1
$region0: #{tpu_custom_call.1}
  #allocation0 [shape = 'u32[]', space=smem, size = 0x4, offset = 0x4, fixed_abs, tag = 'smem constant byte address 0x4 - core index']
  #allocation1 [shape = 'u32[144,128]{1,0:T(1,128)}', space=vmem, size = 0x12000, scoped, tag = 'internal scratch']
  #allocation2 [shape = 'f32[128,1]{1,0:T(8,128)}', space=vmem, size = 0x10000, scoped, tag = 'scratch operand']
  %s0 = inlined_call_operand.vmem [shape: f32[128,128], index: 0, kind: input, shape index: {}]
  %s1 = inlined_call_operand.vmem [shape: f32[128,32], index: 1, kind: input, shape index: {}]
  %s2 = inlined_call_operand.vmem [shape: f32[32,1], index: 2, kind: input, shape index: {}]
  %s3 = inlined_call_operand.vmem [shape: f32[128,1], index: 3, kind: output, shape index: {0}]
  %s4 = inlined_call_operand.vmem [shape: f32[128,1], index: 4, kind: output, shape index: {1}]
  %5 = xla_tuple %s3, %s4
  %s6 = sld [smem:[#allocation0]]
  $region38: #{tpu_custom_call.1} parent=0
    _
  %s8 = ssub.s32 1, %s6
  %s9 = scalar_select 0, %s8, %s6
  // Predicated region
  $region2: #{tpu_custom_call.1} parent=0 // pred_check
    _
  $region3: #{tpu_custom_call.1} parent=0 // pred_check_branch
    %11 = sbr.rel (0) target = $region5
  $region4: #{tpu_custom_call.1} parent=0 // pred_region
    _
  $region5: #{tpu_custom_call.1} parent=0 // pred_fallthru
    _
  // Predicated region
  $region6: #{tpu_custom_call.1} parent=0 // pred_check
    _
  $region7: #{tpu_custom_call.1} parent=0 // pred_check_branch
    %13 = sbr.rel (0) target = $region9
  $region8: #{tpu_custom_call.1} parent=0 // pred_region
    _
  $region9: #{tpu_custom_call.1} parent=0 // pred_fallthru
    _
  // Predicated region
  $region10: #{tpu_custom_call.1} parent=0 // pred_check
    _
  $region11: #{tpu_custom_call.1} parent=0 // pred_check_branch
    %15 = sbr.rel (0) target = $region13
  $region12: #{tpu_custom_call.1} parent=0 // pred_region
    _
  $region13: #{tpu_custom_call.1} parent=0 // pred_fallthru
    _
  %p16 = scmp.eq.s32.totalorder 0, 0
  // Predicated region
  $region14: #{tpu_custom_call.1} parent=0 // pred_check
    %p17 = pneg %p16
  $region15: #{tpu_custom_call.1} parent=0 // pred_check_branch
    %19 = sbr.rel (%p17) target = $region17
  $region16: #{tpu_custom_call.1} parent=0 // pred_region
    %vm20 = vcmask 7168
    %21 = vst.msk [vmem:[#allocation2] sm:$0xff] %vm20, 0.0
    %22 = vst.msk [vmem:[#allocation2 + $0x8] sm:$0xff] %vm20, 0.0
    %23 = vst.msk [vmem:[#allocation2 + $0x10] sm:$0xff] %vm20, 0.0
    %24 = vst.msk [vmem:[#allocation2 + $0x18] sm:$0xff] %vm20, 0.0
    %25 = vst.msk [vmem:[#allocation2 + $0x20] sm:$0xff] %vm20, 0.0
    %26 = vst.msk [vmem:[#allocation2 + $0x28] sm:$0xff] %vm20, 0.0
    %27 = vst.msk [vmem:[#allocation2 + $0x30] sm:$0xff] %vm20, 0.0
    %28 = vst.msk [vmem:[#allocation2 + $0x38] sm:$0xff] %vm20, 0.0
    %29 = vst.msk [vmem:[#allocation2 + $0x40] sm:$0xff] %vm20, 0.0
    %30 = vst.msk [vmem:[#allocation2 + $0x48] sm:$0xff] %vm20, 0.0
    %31 = vst.msk [vmem:[#allocation2 + $0x50] sm:$0xff] %vm20, 0.0
    %32 = vst.msk [vmem:[#allocation2 + $0x58] sm:$0xff] %vm20, 0.0
    %33 = vst.msk [vmem:[#allocation2 + $0x60] sm:$0xff] %vm20, 0.0
    %34 = vst.msk [vmem:[#allocation2 + $0x68] sm:$0xff] %vm20, 0.0
    %35 = vst.msk [vmem:[#allocation2 + $0x70] sm:$0xff] %vm20, 0.0
    %36 = vst.msk [vmem:[#allocation2 + $0x78] sm:$0xff] %vm20, 0.0
  $region17: #{tpu_custom_call.1} parent=0 // pred_fallthru
    _
  %v37 = vld [vmem:[#allocation2] sm:$0xff]
  %v38 = vld [vmem:[#allocation2 + $0x8] sm:$0xff]
  %v39 = vld [vmem:[#allocation2 + $0x10] sm:$0xff]
  %v40 = vld [vmem:[#allocation2 + $0x18] sm:$0xff]
  %v41 = vld [vmem:[#allocation2 + $0x20] sm:$0xff]
  %v42 = vld [vmem:[#allocation2 + $0x28] sm:$0xff]
  %v43 = vld [vmem:[#allocation2 + $0x30] sm:$0xff]
  %v44 = vld [vmem:[#allocation2 + $0x38] sm:$0xff]
  %v45 = vld [vmem:[#allocation2 + $0x40] sm:$0xff]
  %v46 = vld [vmem:[#allocation2 + $0x48] sm:$0xff]
  %v47 = vld [vmem:[#allocation2 + $0x50] sm:$0xff]
  %v48 = vld [vmem:[#allocation2 + $0x58] sm:$0xff]
  %v49 = vld [vmem:[#allocation2 + $0x60] sm:$0xff]
  %v50 = vld [vmem:[#allocation2 + $0x68] sm:$0xff]
  %v51 = vld [vmem:[#allocation2 + $0x70] sm:$0xff]
  %v52 = vld [vmem:[#allocation2 + $0x78] sm:$0xff]
  %v53 = vld [vmem:[%s0] sm:$0xff]
  %v54 = vld [vmem:[%s0 + $0x8] sm:$0xff]
  %v55 = vld [vmem:[%s0 + $0x10] sm:$0xff]
  %v56 = vld [vmem:[%s0 + $0x18] sm:$0xff]
  %v57 = vld [vmem:[%s0 + $0x20] sm:$0xff]
  %v58 = vld [vmem:[%s0 + $0x28] sm:$0xff]
  %v59 = vld [vmem:[%s0 + $0x30] sm:$0xff]
  %v60 = vld [vmem:[%s0 + $0x38] sm:$0xff]
  %v61 = vld [vmem:[%s0 + $0x40] sm:$0xff]
  %v62 = vld [vmem:[%s0 + $0x48] sm:$0xff]
  %v63 = vld [vmem:[%s0 + $0x50] sm:$0xff]
  %v64 = vld [vmem:[%s0 + $0x58] sm:$0xff]
  %v65 = vld [vmem:[%s0 + $0x60] sm:$0xff]
  %v66 = vld [vmem:[%s0 + $0x68] sm:$0xff]
  %v67 = vld [vmem:[%s0 + $0x70] sm:$0xff]
  %v68 = vld [vmem:[%s0 + $0x78] sm:$0xff]
  %69 = vadd.xlane.f32.xlu0 %v53
  %v70 = vpop.xlane.xlu0 %69
  %71 = vadd.xlane.f32.xlu0 %v54
  %v72 = vpop.xlane.xlu0 %71
  %73 = vadd.xlane.f32.xlu0 %v55
  %v74 = vpop.xlane.xlu0 %73
  %75 = vadd.xlane.f32.xlu0 %v56
  %v76 = vpop.xlane.xlu0 %75
  %77 = vadd.xlane.f32.xlu0 %v57
  %v78 = vpop.xlane.xlu0 %77
  %79 = vadd.xlane.f32.xlu0 %v58
  %v80 = vpop.xlane.xlu0 %79
  %81 = vadd.xlane.f32.xlu0 %v59
  %v82 = vpop.xlane.xlu0 %81
  %83 = vadd.xlane.f32.xlu0 %v60
  %v84 = vpop.xlane.xlu0 %83
  %85 = vadd.xlane.f32.xlu0 %v61
  %v86 = vpop.xlane.xlu0 %85
  %87 = vadd.xlane.f32.xlu0 %v62
  %v88 = vpop.xlane.xlu0 %87
  %89 = vadd.xlane.f32.xlu0 %v63
  %v90 = vpop.xlane.xlu0 %89
  %91 = vadd.xlane.f32.xlu0 %v64
  %v92 = vpop.xlane.xlu0 %91
  %93 = vadd.xlane.f32.xlu0 %v65
  %v94 = vpop.xlane.xlu0 %93
  %95 = vadd.xlane.f32.xlu0 %v66
  %v96 = vpop.xlane.xlu0 %95
  %97 = vadd.xlane.f32.xlu0 %v67
  %v98 = vpop.xlane.xlu0 %97
  %99 = vadd.xlane.f32.xlu0 %v68
  %v100 = vpop.xlane.xlu0 %99
  %v101 = vadd.f32 %v37, %v70
  %v102 = vadd.f32 %v38, %v72
  %v103 = vadd.f32 %v39, %v74
  %v104 = vadd.f32 %v40, %v76
  %v105 = vadd.f32 %v41, %v78
  %v106 = vadd.f32 %v42, %v80
  %v107 = vadd.f32 %v43, %v82
  %v108 = vadd.f32 %v44, %v84
  %v109 = vadd.f32 %v45, %v86
  %v110 = vadd.f32 %v46, %v88
  %v111 = vadd.f32 %v47, %v90
  %v112 = vadd.f32 %v48, %v92
  %v113 = vadd.f32 %v49, %v94
  %v114 = vadd.f32 %v50, %v96
  %v115 = vadd.f32 %v51, %v98
  %v116 = vadd.f32 %v52, %v100
  %vm117 = vcmask 7168
  %118 = vst.msk [vmem:[#allocation2] sm:$0xff] %vm117, %v101
  %119 = vst.msk [vmem:[#allocation2 + $0x8] sm:$0xff] %vm117, %v102
  %120 = vst.msk [vmem:[#allocation2 + $0x10] sm:$0xff] %vm117, %v103
  %121 = vst.msk [vmem:[#allocation2 + $0x18] sm:$0xff] %vm117, %v104
  %122 = vst.msk [vmem:[#allocation2 + $0x20] sm:$0xff] %vm117, %v105
  %123 = vst.msk [vmem:[#allocation2 + $0x28] sm:$0xff] %vm117, %v106
  %124 = vst.msk [vmem:[#allocation2 + $0x30] sm:$0xff] %vm117, %v107
  %125 = vst.msk [vmem:[#allocation2 + $0x38] sm:$0xff] %vm117, %v108
  %126 = vst.msk [vmem:[#allocation2 + $0x40] sm:$0xff] %vm117, %v109
  %127 = vst.msk [vmem:[#allocation2 + $0x48] sm:$0xff] %vm117, %v110
  %128 = vst.msk [vmem:[#allocation2 + $0x50] sm:$0xff] %vm117, %v111
  %129 = vst.msk [vmem:[#allocation2 + $0x58] sm:$0xff] %vm117, %v112
  %130 = vst.msk [vmem:[#allocation2 + $0x60] sm:$0xff] %vm117, %v113
  %131 = vst.msk [vmem:[#allocation2 + $0x68] sm:$0xff] %vm117, %v114
  %132 = vst.msk [vmem:[#allocation2 + $0x70] sm:$0xff] %vm117, %v115
  %133 = vst.msk [vmem:[#allocation2 + $0x78] sm:$0xff] %vm117, %v116
  // Predicated region
  $region18: #{tpu_custom_call.1} parent=0 // pred_check
    %p134 = pneg %p16
  $region19: #{tpu_custom_call.1} parent=0 // pred_check_branch
    %136 = sbr.rel (%p134) target = $region21
  $region20: #{tpu_custom_call.1} parent=0 // pred_region
    %v137 = vld [vmem:[#allocation2] sm:$0xff]
    %v138 = vld [vmem:[#allocation2 + $0x8] sm:$0xff]
    %v139 = vld [vmem:[#allocation2 + $0x10] sm:$0xff]
    %v140 = vld [vmem:[#allocation2 + $0x18] sm:$0xff]
    %v141 = vld [vmem:[#allocation2 + $0x20] sm:$0xff]
    %v142 = vld [vmem:[#allocation2 + $0x28] sm:$0xff]
    %v143 = vld [vmem:[#allocation2 + $0x30] sm:$0xff]
    %v144 = vld [vmem:[#allocation2 + $0x38] sm:$0xff]
    %v145 = vld [vmem:[#allocation2 + $0x40] sm:$0xff]
    %v146 = vld [vmem:[#allocation2 + $0x48] sm:$0xff]
    %v147 = vld [vmem:[#allocation2 + $0x50] sm:$0xff]
    %v148 = vld [vmem:[#allocation2 + $0x58] sm:$0xff]
    %v149 = vld [vmem:[#allocation2 + $0x60] sm:$0xff]
    %v150 = vld [vmem:[#allocation2 + $0x68] sm:$0xff]
    %v151 = vld [vmem:[#allocation2 + $0x70] sm:$0xff]
    %v152 = vld [vmem:[#allocation2 + $0x78] sm:$0xff]
    %v153 = vmax.f32 %v137, 1.0
    %v154 = vmax.f32 %v138, 1.0
    %v155 = vmax.f32 %v139, 1.0
    %v156 = vmax.f32 %v140, 1.0
    %v157 = vmax.f32 %v141, 1.0
    %v158 = vmax.f32 %v142, 1.0
    %v159 = vmax.f32 %v143, 1.0
    %v160 = vmax.f32 %v144, 1.0
    %v161 = vmax.f32 %v145, 1.0
    %v162 = vmax.f32 %v146, 1.0
    %v163 = vmax.f32 %v147, 1.0
    %v164 = vmax.f32 %v148, 1.0
    %v165 = vmax.f32 %v149, 1.0
    %v166 = vmax.f32 %v150, 1.0
    %v167 = vmax.f32 %v151, 1.0
    %v168 = vmax.f32 %v152, 1.0
    %v169 = vrsqrt.pop %v153
    %v170 = vrsqrt.pop %v154
    %v171 = vrsqrt.pop %v155
    %v172 = vrsqrt.pop %v156
    %v173 = vrsqrt.pop %v157
    %v174 = vrsqrt.pop %v158
    %v175 = vrsqrt.pop %v159
    %v176 = vrsqrt.pop %v160
    %v177 = vrsqrt.pop %v161
    %v178 = vrsqrt.pop %v162
    %v179 = vrsqrt.pop %v163
    %v180 = vrsqrt.pop %v164
    %v181 = vrsqrt.pop %v165
    %v182 = vrsqrt.pop %v166
    %v183 = vrsqrt.pop %v167
    %v184 = vrsqrt.pop %v168
    %185 = vst.msk [vmem:[%s3] sm:$0xff] %vm117, %v169
    %186 = vst.msk [vmem:[%s3 + $0x8] sm:$0xff] %vm117, %v170
    %187 = vst.msk [vmem:[%s3 + $0x10] sm:$0xff] %vm117, %v171
    %188 = vst.msk [vmem:[%s3 + $0x18] sm:$0xff] %vm117, %v172
    %189 = vst.msk [vmem:[%s3 + $0x20] sm:$0xff] %vm117, %v173
    %190 = vst.msk [vmem:[%s3 + $0x28] sm:$0xff] %vm117, %v174
    %191 = vst.msk [vmem:[%s3 + $0x30] sm:$0xff] %vm117, %v175
    %192 = vst.msk [vmem:[%s3 + $0x38] sm:$0xff] %vm117, %v176
    %193 = vst.msk [vmem:[%s3 + $0x40] sm:$0xff] %vm117, %v177
    %194 = vst.msk [vmem:[%s3 + $0x48] sm:$0xff] %vm117, %v178
    %195 = vst.msk [vmem:[%s3 + $0x50] sm:$0xff] %vm117, %v179
    %196 = vst.msk [vmem:[%s3 + $0x58] sm:$0xff] %vm117, %v180
    %197 = vst.msk [vmem:[%s3 + $0x60] sm:$0xff] %vm117, %v181
    %198 = vst.msk [vmem:[%s3 + $0x68] sm:$0xff] %vm117, %v182
    %199 = vst.msk [vmem:[%s3 + $0x70] sm:$0xff] %vm117, %v183
    %200 = vst.msk [vmem:[%s3 + $0x78] sm:$0xff] %vm117, %v184
    %v201 = vld [vmem:[%s1] sm:$0xff]
    %v202 = vld [vmem:[%s1 + $0x8] sm:$0xff]
    %v203 = vld [vmem:[%s1 + $0x10] sm:$0xff]
    %v204 = vld [vmem:[%s1 + $0x18] sm:$0xff]
    %v205 = vld [vmem:[%s1 + $0x20] sm:$0xff]
    %v206 = vld [vmem:[%s1 + $0x28] sm:$0xff]
    %v207 = vld [vmem:[%s1 + $0x30] sm:$0xff]
    %v208 = vld [vmem:[%s1 + $0x38] sm:$0xff]
    %v209 = vld [vmem:[%s1 + $0x40] sm:$0xff]
    %v210 = vld [vmem:[%s1 + $0x48] sm:$0xff]
    %v211 = vld [vmem:[%s1 + $0x50] sm:$0xff]
    %v212 = vld [vmem:[%s1 + $0x58] sm:$0xff]
    %v213 = vld [vmem:[%s1 + $0x60] sm:$0xff]
    %v214 = vld [vmem:[%s1 + $0x68] sm:$0xff]
    %v215 = vld [vmem:[%s1 + $0x70] sm:$0xff]
    %v216 = vld [vmem:[%s1 + $0x78] sm:$0xff]
    %v217 = vld [vmem:[%s2] sm:$0xff]
    %v218 = vld [vmem:[%s2 + $0x8] sm:$0xff]
    %v219 = vld [vmem:[%s2 + $0x10] sm:$0xff]
    %v220 = vld [vmem:[%s2 + $0x18] sm:$0xff]
    %vm221 = vcmask 261120
    %v223 = vsel %vm221, %v201, 0
    %v226 = vsel %vm221, %v202, 0
    %v229 = vsel %vm221, %v203, 0
    %v232 = vsel %vm221, %v204, 0
    %v235 = vsel %vm221, %v205, 0
    %v238 = vsel %vm221, %v206, 0
    %v241 = vsel %vm221, %v207, 0
    %v244 = vsel %vm221, %v208, 0
    %v247 = vsel %vm221, %v209, 0
    %v250 = vsel %vm221, %v210, 0
    %v253 = vsel %vm221, %v211, 0
    %v256 = vsel %vm221, %v212, 0
    %v259 = vsel %vm221, %v213, 0
    %v262 = vsel %vm221, %v214, 0
    %v265 = vsel %vm221, %v215, 0
    %v268 = vsel %vm221, %v216, 0
    %270 = vmatprep.subr.mxu0 0.0
    %271 = vmatpush1.msra.mxu0 0.0
    %272 = vmatprep.subr.mxu0 0.0
    %273 = vmatpush1.msra.mxu0 0.0
    %274 = vmatprep.subr.mxu0 0.0
    %275 = vmatpush1.msra.mxu0 0.0
    %276 = vmatprep.subr.mxu0 0.0
    %277 = vmatpush1.msra.mxu0 0.0
    %278 = vmatprep.subr.mxu0 0.0
    %279 = vmatpush1.msra.mxu0 0.0
    %280 = vmatprep.subr.mxu0 0.0
    %281 = vmatpush1.msra.mxu0 0.0
    %282 = vmatprep.subr.mxu0 0.0
    %283 = vmatpush1.msra.mxu0 0.0
    %284 = vmatprep.subr.mxu0 0.0
    %285 = vmatpush1.msra.mxu0 0.0
    %286 = vmatprep.subr.mxu0 0.0
    %287 = vmatpush1.msra.mxu0 0.0
    %288 = vmatprep.subr.mxu0 0.0
    %289 = vmatpush1.msra.mxu0 0.0
    %290 = vmatprep.subr.mxu0 0.0
    %291 = vmatpush1.msra.mxu0 0.0
    %292 = vmatprep.subr.mxu0 0.0
    %293 = vmatpush1.msra.mxu0 0.0
    %294 = vmatprep.subr.mxu0 0.0
    %295 = vmatpush1.msra.mxu0 %v220
    %296 = vmatprep.subr.mxu0 0.0
    %297 = vmatpush1.msra.mxu0 %v219
    %298 = vmatprep.subr.mxu0 0.0
    %299 = vmatpush1.msra.mxu0 %v218
    %300 = vmatprep.subr.mxu0 0.0
    %301 = vmatpush1.msra.mxu0 %v217
    %302 = vmatprep.subr.mxu0 0.0
    %303 = vmatpush2.msra.mxu0 0.0
    %304 = vmatprep.subr.mxu0 0.0
    %305 = vmatpush2.msra.mxu0 0.0
    %306 = vmatprep.subr.mxu0 0.0
    %307 = vmatpush2.msra.mxu0 0.0
    %308 = vmatprep.subr.mxu0 0.0
    %309 = vmatpush2.msra.mxu0 0.0
    %310 = vmatprep.subr.mxu0 0.0
    %311 = vmatpush2.msra.mxu0 0.0
    %312 = vmatprep.subr.mxu0 0.0
    %313 = vmatpush2.msra.mxu0 0.0
    %314 = vmatprep.subr.mxu0 0.0
    %315 = vmatpush2.msra.mxu0 0.0
    %316 = vmatprep.subr.mxu0 0.0
    %317 = vmatpush2.msra.mxu0 0.0
    %318 = vmatprep.subr.mxu0 0.0
    %319 = vmatpush2.msra.mxu0 0.0
    %320 = vmatprep.subr.mxu0 0.0
    %321 = vmatpush2.msra.mxu0 0.0
    %322 = vmatprep.subr.mxu0 0.0
    %323 = vmatpush2.msra.mxu0 0.0
    %324 = vmatprep.subr.mxu0 0.0
    %325 = vmatpush2.msra.mxu0 0.0
    %326 = vmatprep.subr.mxu0 0.0
    %327 = vmatpush2.msra.mxu0 0.0
    %328 = vmatprep.subr.mxu0 0.0
    %329 = vmatpush2.msra.mxu0 0.0
    %330 = vmatprep.subr.mxu0 0.0
    %331 = vmatpush2.msra.mxu0 0.0
    %332 = vmatprep.subr.mxu0 0.0
    %333 = vmatpush2.msra.mxu0 0.0
    %334 = vmatprep.mubr.f32.mxu0 0.0
    %335 = vmatmul.mubr.f32.gmra.mxu0 %v223
    %v336 = vpop.f32.mrf.mxu0
    %v337 = vadd.f32 0.0, %v336
    %v338 = vpop.f32.mrf.mxu0
    %339 = vmatprep.mubr.f32.mxu0 0.0
    %340 = vmatmul.mubr.f32.gmra.mxu0 %v226
    %v341 = vpop.f32.mrf.mxu0
    %v342 = vadd.f32 0.0, %v341
    %v343 = vpop.f32.mrf.mxu0
    %344 = vmatprep.mubr.f32.mxu0 0.0
    %345 = vmatmul.mubr.f32.gmra.mxu0 %v229
    %v346 = vpop.f32.mrf.mxu0
    %v347 = vadd.f32 0.0, %v346
    %v348 = vpop.f32.mrf.mxu0
    %349 = vmatprep.mubr.f32.mxu0 0.0
    %350 = vmatmul.mubr.f32.gmra.mxu0 %v232
    %v351 = vpop.f32.mrf.mxu0
    %v352 = vadd.f32 0.0, %v351
    %v353 = vpop.f32.mrf.mxu0
    %354 = vmatprep.mubr.f32.mxu0 0.0
    %355 = vmatmul.mubr.f32.gmra.mxu0 %v235
    %v356 = vpop.f32.mrf.mxu0
    %v357 = vadd.f32 0.0, %v356
    %v358 = vpop.f32.mrf.mxu0
    %359 = vmatprep.mubr.f32.mxu0 0.0
    %360 = vmatmul.mubr.f32.gmra.mxu0 %v238
    %v361 = vpop.f32.mrf.mxu0
    %v362 = vadd.f32 0.0, %v361
    %v363 = vpop.f32.mrf.mxu0
    %364 = vmatprep.mubr.f32.mxu0 0.0
    %365 = vmatmul.mubr.f32.gmra.mxu0 %v241
    %v366 = vpop.f32.mrf.mxu0
    %v367 = vadd.f32 0.0, %v366
    %v368 = vpop.f32.mrf.mxu0
    %369 = vmatprep.mubr.f32.mxu0 0.0
    %370 = vmatmul.mubr.f32.gmra.mxu0 %v244
    %v371 = vpop.f32.mrf.mxu0
    %v372 = vadd.f32 0.0, %v371
    %v373 = vpop.f32.mrf.mxu0
    %374 = vmatprep.mubr.f32.mxu0 0.0
    %375 = vmatmul.mubr.f32.gmra.mxu0 %v247
    %v376 = vpop.f32.mrf.mxu0
    %v377 = vadd.f32 0.0, %v376
    %v378 = vpop.f32.mrf.mxu0
    %379 = vmatprep.mubr.f32.mxu0 0.0
    %380 = vmatmul.mubr.f32.gmra.mxu0 %v250
    %v381 = vpop.f32.mrf.mxu0
    %v382 = vadd.f32 0.0, %v381
    %v383 = vpop.f32.mrf.mxu0
    %384 = vmatprep.mubr.f32.mxu0 0.0
    %385 = vmatmul.mubr.f32.gmra.mxu0 %v253
    %v386 = vpop.f32.mrf.mxu0
    %v387 = vadd.f32 0.0, %v386
    %v388 = vpop.f32.mrf.mxu0
    %389 = vmatprep.mubr.f32.mxu0 0.0
    %390 = vmatmul.mubr.f32.gmra.mxu0 %v256
    %v391 = vpop.f32.mrf.mxu0
    %v392 = vadd.f32 0.0, %v391
    %v393 = vpop.f32.mrf.mxu0
    %394 = vmatprep.mubr.f32.mxu0 0.0
    %395 = vmatmul.mubr.f32.gmra.mxu0 %v259
    %v396 = vpop.f32.mrf.mxu0
    %v397 = vadd.f32 0.0, %v396
    %v398 = vpop.f32.mrf.mxu0
    %399 = vmatprep.mubr.f32.mxu0 0.0
    %400 = vmatmul.mubr.f32.gmra.mxu0 %v262
    %v401 = vpop.f32.mrf.mxu0
    %v402 = vadd.f32 0.0, %v401
    %v403 = vpop.f32.mrf.mxu0
    %404 = vmatprep.mubr.f32.mxu0 0.0
    %405 = vmatmul.mubr.f32.gmra.mxu0 %v265
    %v406 = vpop.f32.mrf.mxu0
    %v407 = vadd.f32 0.0, %v406
    %v408 = vpop.f32.mrf.mxu0
    %409 = vmatprep.mubr.f32.mxu0 0.0
    %410 = vmatmul.mubr.f32.gmra.mxu0 %v268
    %v411 = vpop.f32.mrf.mxu0
    %v412 = vadd.f32 0.0, %v411
    %v413 = vpop.f32.mrf.mxu0
    %414 = vdwg.mxu0
    %v415 = vmul.f32 %v169, %v337
    %v416 = vmul.f32 %v170, %v342
    %v417 = vmul.f32 %v171, %v347
    %v418 = vmul.f32 %v172, %v352
    %v419 = vmul.f32 %v173, %v357
    %v420 = vmul.f32 %v174, %v362
    %v421 = vmul.f32 %v175, %v367
    %v422 = vmul.f32 %v176, %v372
    %v423 = vmul.f32 %v177, %v377
    %v424 = vmul.f32 %v178, %v382
    %v425 = vmul.f32 %v179, %v387
    %v426 = vmul.f32 %v180, %v392
    %v427 = vmul.f32 %v181, %v397
    %v428 = vmul.f32 %v182, %v402
    %v429 = vmul.f32 %v183, %v407
    %v430 = vmul.f32 %v184, %v412
    %431 = vst.msk [vmem:[%s4] sm:$0xff] %vm117, %v415
    %432 = vst.msk [vmem:[%s4 + $0x8] sm:$0xff] %vm117, %v416
    %433 = vst.msk [vmem:[%s4 + $0x10] sm:$0xff] %vm117, %v417
    %434 = vst.msk [vmem:[%s4 + $0x18] sm:$0xff] %vm117, %v418
    %435 = vst.msk [vmem:[%s4 + $0x20] sm:$0xff] %vm117, %v419
    %436 = vst.msk [vmem:[%s4 + $0x28] sm:$0xff] %vm117, %v420
    %437 = vst.msk [vmem:[%s4 + $0x30] sm:$0xff] %vm117, %v421
    %438 = vst.msk [vmem:[%s4 + $0x38] sm:$0xff] %vm117, %v422
    %439 = vst.msk [vmem:[%s4 + $0x40] sm:$0xff] %vm117, %v423
    %440 = vst.msk [vmem:[%s4 + $0x48] sm:$0xff] %vm117, %v424
    %441 = vst.msk [vmem:[%s4 + $0x50] sm:$0xff] %vm117, %v425
    %442 = vst.msk [vmem:[%s4 + $0x58] sm:$0xff] %vm117, %v426
    %443 = vst.msk [vmem:[%s4 + $0x60] sm:$0xff] %vm117, %v427
    %444 = vst.msk [vmem:[%s4 + $0x68] sm:$0xff] %vm117, %v428
    %445 = vst.msk [vmem:[%s4 + $0x70] sm:$0xff] %vm117, %v429
    %446 = vst.msk [vmem:[%s4 + $0x78] sm:$0xff] %vm117, %v430
  $region21: #{tpu_custom_call.1} parent=0 // pred_fallthru
    _
  // Predicated region
  $region22: #{tpu_custom_call.1} parent=0 // pred_check
    _
  $region23: #{tpu_custom_call.1} parent=0 // pred_check_branch
    %448 = sbr.rel (0) target = $region25
  $region24: #{tpu_custom_call.1} parent=0 // pred_region
    _
  $region25: #{tpu_custom_call.1} parent=0 // pred_fallthru
    _
  // Predicated region
  $region26: #{tpu_custom_call.1} parent=0 // pred_check
    _
  $region27: #{tpu_custom_call.1} parent=0 // pred_check_branch
    %450 = sbr.rel (0) target = $region29
  $region28: #{tpu_custom_call.1} parent=0 // pred_region
    _
  $region29: #{tpu_custom_call.1} parent=0 // pred_fallthru
    _
  // Predicated region
  $region30: #{tpu_custom_call.1} parent=0 // pred_check
    _
  $region31: #{tpu_custom_call.1} parent=0 // pred_check_branch
    %452 = sbr.rel (0) target = $region33
  $region32: #{tpu_custom_call.1} parent=0 // pred_region
    _
  $region33: #{tpu_custom_call.1} parent=0 // pred_fallthru
    _
  // Predicated region
  $region34: #{tpu_custom_call.1} parent=0 // pred_check
    _
  $region35: #{tpu_custom_call.1} parent=0 // pred_check_branch
    %454 = sbr.rel (0) target = $region37
  $region36: #{tpu_custom_call.1} parent=0 // pred_region
    _
  $region37: #{tpu_custom_call.1} parent=0 // pred_fallthru
    _

</llo_original>
